<compile_context>
chip_gen: v6e
topology: v6e:2x2x1
jax: 0.10.0
libtpu: 0.0.40
codegen_flags: <defaults>
</compile_context>

<pallas_src>
import functools

import jax
import jax.numpy as jnp
from jax.experimental import pallas as pl
from jax.experimental.pallas import tpu as pltpu


def _round_up(x, m):
    return ((x + m - 1) // m) * m


def _npair_loss_kernel(anchors_ref, others_ref, positives_ref, negmask_ref,
                       loss_ref, sum_acc, cnt_acc, *, half, row_tile):
    # anchors_ref   : (tm, D)  f32   anchor rows of this tile (padded rows = 0)
    # others_ref    : (2N, D)  f32   all "other" embeddings (resident)
    # positives_ref : (tm, D)  f32   rows i+N matching this tile's anchors
    # negmask_ref   : (tm, 2N) int8  negative mask rows for this tile
    # loss_ref      : (1, 1)   f32   final scalar loss (written on last step)
    # sum_acc/cnt_acc: (1, 1)  f32   running sum(j) / count of valid rows
    i = pl.program_id(0)

    @pl.when(i == 0)
    def _init():
        sum_acc[...] = jnp.zeros_like(sum_acc)
        cnt_acc[...] = jnp.zeros_like(cnt_acc)

    a = anchors_ref[...]                                  # (tm, D)
    p = positives_ref[...]                                # (tm, D)

    # d_top[r, k] = <anchor_r, other_k>; contraction on last dims of both
    # operands -> MXU consumes RHS directly, no XLU transpose / extra copy.
    d_top = jax.lax.dot_general(
        a, others_ref[...], (((1,), (1,)), ((), ())),
        preferred_element_type=jnp.float32)               # (tm, 2N)

    # Positive-pair similarity, computed directly (independent of MXU output).
    ap = jnp.sum(a * p, axis=-1, keepdims=True)           # (tm, 1)

    expm = jnp.exp(d_top - ap)                            # (tm, 2N)
    nm = negmask_ref[...] != 0                            # (tm, 2N) bool
    s = jnp.sum(jnp.where(nm, expm, 0.0), axis=-1, keepdims=True)   # (tm, 1)
    j = jnp.log(s + 1.0)                                  # (tm, 1)

    # Drop padding rows and (like the torch code) rows whose j is NaN.
    rows = i * row_tile + jax.lax.broadcasted_iota(jnp.int32, j.shape, 0)
    valid = jnp.logical_and(rows < half, jnp.logical_not(jnp.isnan(j)))
    j_safe = jnp.where(valid, j, 0.0)

    sum_acc[...] += jnp.sum(j_safe, keepdims=True)
    cnt_acc[...] += jnp.sum(valid.astype(jnp.float32), keepdims=True)

    @pl.when(i == pl.num_programs(0) - 1)
    def _finalize():
        # If every row were NaN this yields 0/0 = NaN (documented behaviour).
        loss_ref[...] = sum_acc[...] / cnt_acc[...]


def npair_loss(embeddings, neg_mask, other_embeddings=None, *, row_tile=256):
    """Pallas NPairLoss forward.

    embeddings:        (2N, D) float
    neg_mask:          (2N, 2N) bool / {0,1}  (only the first N rows are used)
    other_embeddings:  optional (2N, D) float
    returns:           scalar float32 loss
    """
    if other_embeddings is None:
        other_embeddings = embeddings
    emb = jnp.asarray(embeddings, jnp.float32)
    oth = jnp.asarray(other_embeddings, jnp.float32)
    two_n, dim = emb.shape
    half = two_n // 2

    # Slice before the DMA: only anchor rows, matching positive rows and the
    # first N mask rows are ever read.  Mask travels as int8 (1 byte/elem).
    # TODO(synk): optionally cast anchors/oth to bf16 here (~2x MXU, half the
    # embedding DMA) if exact f32 parity is not required.
    anchors = emb[:half]                                   # (N, D)
    positives = oth[half:]                                 # (N, D)
    negmask = jnp.asarray(neg_mask, jnp.int8)[:half]       # (N, 2N)

    # Pad the anchor-row axis to a sublane-aligned tile size that divides the
    # grid evenly; padded rows are masked out inside the kernel.
    if half <= row_tile:
        tm = _round_up(max(half, 1), 8)
    else:
        tm = row_tile                                      # multiple of 256
    half_pad = _round_up(half, tm)
    pad = half_pad - half
    if pad:
        anchors = jnp.pad(anchors, ((0, pad), (0, 0)))
        positives = jnp.pad(positives, ((0, pad), (0, 0)))
        negmask = jnp.pad(negmask, ((0, pad), (0, 0)))

    grid = (half_pad // tm,)
    kernel = functools.partial(_npair_loss_kernel, half=half, row_tile=tm)
    out = pl.pallas_call(
        kernel,
        out_shape=jax.ShapeDtypeStruct((1, 1), jnp.float32),
        grid=grid,
        in_specs=[
            pl.BlockSpec((tm, dim), lambda i: (i, 0)),      # anchor-row tile
            pl.BlockSpec((two_n, dim), lambda i: (0, 0)),   # all others (resident)
            pl.BlockSpec((tm, dim), lambda i: (i, 0)),      # positive-row tile
            pl.BlockSpec((tm, two_n), lambda i: (i, 0)),    # int8 neg-mask tile
        ],
        out_specs=pl.BlockSpec((1, 1), lambda i: (0, 0)),
        scratch_shapes=[
            pltpu.VMEM((1, 1), jnp.float32),                # sum(j_safe)
            pltpu.VMEM((1, 1), jnp.float32),                # count(valid)
        ],
        compiler_params=pltpu.CompilerParams(
            dimension_semantics=("arbitrary",),             # scalar accumulator
            vmem_limit_bytes=32 * 1024 * 1024,
        ),
    )(anchors, oth, positives, negmask)
    return out[0, 0]


def _reference_npair_loss(embeddings, neg_mask, other_embeddings=None):
    # Pure-JAX reference mirroring the PyTorch forward (no NaNs in the test).
    if other_embeddings is None:
        other_embeddings = embeddings
    d = jnp.dot(embeddings, other_embeddings.T,
                precision=jax.lax.Precision.HIGHEST)
    half = embeddings.shape[0] // 2
    js = []
    for i in range(half):
        ap = d[i, i + half]
        expm = jnp.exp(d[i] - ap)
        j_ij = jnp.log(jnp.sum(jnp.where(neg_mask[i], expm, 0.0)) + 1.0)
        js.append(j_ij)
    return jnp.mean(jnp.stack(js))


if __name__ == "__main__":
    key = jax.random.PRNGKey(0)
    N = 4          # number of anchor/positive pairs
    D = 32         # embedding dim
    two_n = 2 * N

    k_emb, k_other = jax.random.split(key)
    embeddings = jax.random.normal(k_emb, (two_n, D), dtype=jnp.float32)
    other = jax.random.normal(k_other, (two_n, D), dtype=jnp.float32)

    # Standard N-pair negative mask: everything except self and the positive.
    idx = jnp.arange(two_n)
    self_mask = idx[:, None] == idx[None, :]
    pos_mask = idx[:, None] == ((idx[None, :] + N) % two_n)
    neg_mask = jnp.logical_not(jnp.logical_or(self_mask, pos_mask))

    loss = npair_loss(embeddings, neg_mask)
    jax.block_until_ready(loss)
    ref = _reference_npair_loss(embeddings, neg_mask)
    assert jnp.allclose(loss, ref, rtol=1e-4, atol=1e-5), (loss, ref)

    loss2 = npair_loss(embeddings, neg_mask, other_embeddings=other)
    jax.block_until_ready(loss2)
    ref2 = _reference_npair_loss(embeddings, neg_mask, other_embeddings=other)
    assert jnp.allclose(loss2, ref2, rtol=1e-4, atol=1e-5), (loss2, ref2)

    print("KERNEL_OK")
</pallas_src>

<mosaic_0001>
module attributes {stable_mosaic.version = 11 : i64} {
  func.func @_npair_loss_kernel(%arg0: i32, %arg1: memref<8x32xf32, #tpu.memory_space<vmem>>, %arg2: memref<8x32xf32, #tpu.memory_space<vmem>>, %arg3: memref<8x32xf32, #tpu.memory_space<vmem>>, %arg4: memref<8x8xi8, #tpu.memory_space<vmem>>, %arg5: memref<1x1xf32, #tpu.memory_space<vmem>>, %arg6: memref<1x1xf32, #tpu.memory_space<vmem>>, %arg7: memref<1x1xf32, #tpu.memory_space<vmem>>) attributes {dimension_semantics = [#tpu.dimension_semantics<arbitrary>], iteration_bounds = array<i64: 1>, scalar_prefetch = 0 : i64, scratch_operands = 2 : i64, tpu.core_type = #tpu.core_type<tc>, window_params = [{transform_indices = @transform_0, window_bounds = array<i64: 8, 32>}, {pipeline_mode = #tpu.pipeline_mode<synchronous>, transform_indices = @transform_1, window_bounds = array<i64: 8, 32>}, {transform_indices = @transform_2, window_bounds = array<i64: 8, 32>}, {transform_indices = @transform_3, window_bounds = array<i64: 8, 8>}, {pipeline_mode = #tpu.pipeline_mode<synchronous>, transform_indices = @transform_4, window_bounds = array<i64: 1, 1>}]} {
    %c0_i32 = arith.constant 0 : i32
    %0 = arith.cmpi eq, %arg0, %c0_i32 : i32
    %1 = arith.extui %0 : i1 to i32
    %c0_i32_0 = arith.constant 0 : i32
    %2 = arith.cmpi ne, %1, %c0_i32_0 : i32
    scf.if %2 {
      %cst_26 = arith.constant 0.000000e+00 : f32
      %55 = vector.broadcast %cst_26 : f32 to vector<1x1xf32>
      %c0_27 = arith.constant 0 : index
      %c0_28 = arith.constant 0 : index
      %56 = vector.load %arg6[%c0_27, %c0_28] : memref<1x1xf32, #tpu.memory_space<vmem>>, vector<1x1xf32>
      tpu.vector_store %arg6[%c0_27, %c0_28], %55 {strides = array<i32>} : memref<1x1xf32, #tpu.memory_space<vmem>>, vector<1x1xf32>,
      %cst_29 = arith.constant 0.000000e+00 : f32
      %57 = vector.broadcast %cst_29 : f32 to vector<1x1xf32>
      %c0_30 = arith.constant 0 : index
      %c0_31 = arith.constant 0 : index
      %58 = vector.load %arg7[%c0_30, %c0_31] : memref<1x1xf32, #tpu.memory_space<vmem>>, vector<1x1xf32>
      tpu.vector_store %arg7[%c0_30, %c0_31], %57 {strides = array<i32>} : memref<1x1xf32, #tpu.memory_space<vmem>>, vector<1x1xf32>,
    } else {
    }
    %c0 = arith.constant 0 : index
    %c0_1 = arith.constant 0 : index
    %3 = vector.load %arg1[%c0, %c0_1] : memref<8x32xf32, #tpu.memory_space<vmem>>, vector<8x32xf32>
    %c0_2 = arith.constant 0 : index
    %c0_3 = arith.constant 0 : index
    %4 = vector.load %arg3[%c0_2, %c0_3] : memref<8x32xf32, #tpu.memory_space<vmem>>, vector<8x32xf32>
    %c0_4 = arith.constant 0 : index
    %c0_5 = arith.constant 0 : index
    %5 = vector.load %arg2[%c0_4, %c0_5] : memref<8x32xf32, #tpu.memory_space<vmem>>, vector<8x32xf32>
    %cst = arith.constant dense<0.000000e+00> : vector<8x8xf32>
    %6 = tpu.matmul %3, %5, %cst {dimension_numbers = #tpu.dot_dimension_numbers<[1], [1], [0], [0], [0, 0, 1, 0], [], []>} : vector<8x32xf32>, vector<8x32xf32>, vector<8x8xf32> -> vector<8x8xf32>
    %7 = arith.mulf %3, %4 : vector<8x32xf32>
    %cst_6 = arith.constant dense<0.000000e+00> : vector<8xf32>
    %8 = vector.multi_reduction <add>, %7, %cst_6 [1] : vector<8x32xf32> to vector<8xf32>
    %9 = vector.shape_cast %8 : vector<8xf32> to vector<8x1xf32>
    %10 = vector.broadcast %9 : vector<8x1xf32> to vector<8x8xf32>
    %11 = arith.subf %6, %10 : vector<8x8xf32>
    %12 = math.exp %11 : vector<8x8xf32>
    %c0_7 = arith.constant 0 : index
    %c0_8 = arith.constant 0 : index
    %13 = vector.load %arg4[%c0_7, %c0_8] : memref<8x8xi8, #tpu.memory_space<vmem>>, vector<8x8xi8>
    %c0_i8 = arith.constant 0 : i8
    %14 = vector.broadcast %c0_i8 : i8 to vector<8x8xi8>
    %15 = arith.cmpi ne, %13, %14 : vector<8x8xi8>
    %cst_9 = arith.constant 0.000000e+00 : f32
    %16 = vector.broadcast %cst_9 : f32 to vector<8x8xf32>
    %17 = arith.select %15, %12, %16 : vector<8x8xi1>, vector<8x8xf32>
    %cst_10 = arith.constant dense<0.000000e+00> : vector<8xf32>
    %18 = vector.multi_reduction <add>, %17, %cst_10 [1] : vector<8x8xf32> to vector<8xf32>
    %19 = vector.shape_cast %18 : vector<8xf32> to vector<8x1xf32>
    %cst_11 = arith.constant 1.000000e+00 : f32
    %20 = vector.broadcast %cst_11 : f32 to vector<8x1xf32>
    %21 = arith.addf %19, %20 : vector<8x1xf32>
    %22 = math.log %21 : vector<8x1xf32>
    %c8_i32 = arith.constant 8 : i32
    %23 = arith.muli %arg0, %c8_i32 : i32
    %24 = tpu.iota {dimensions = array<i32: 0>} : vector<8x1xi32>
    %25 = vector.broadcast %23 : i32 to vector<8x1xi32>
    %26 = arith.addi %25, %24 : vector<8x1xi32>
    %c4_i32 = arith.constant 4 : i32
    %27 = vector.broadcast %c4_i32 : i32 to vector<8x1xi32>
    %28 = arith.cmpi slt, %26, %27 : vector<8x1xi32>
    %29 = arith.cmpf one, %22, %22 : vector<8x1xf32>
    %cst_12 = arith.constant dense<true> : vector<8x1xi1>
    %30 = arith.xori %29, %cst_12 : vector<8x1xi1>
    %31 = arith.andi %28, %30 : vector<8x1xi1>
    %cst_13 = arith.constant 0.000000e+00 : f32
    %32 = vector.broadcast %cst_13 : f32 to vector<8x1xf32>
    %33 = arith.select %31, %22, %32 : vector<8x1xi1>, vector<8x1xf32>
    %c0_14 = arith.constant 0 : index
    %c0_15 = arith.constant 0 : index
    %34 = vector.load %arg6[%c0_14, %c0_15] : memref<1x1xf32, #tpu.memory_space<vmem>>, vector<1x1xf32>
    %35 = vector.shape_cast %33 : vector<8x1xf32> to vector<1x8x1xf32>
    %cst_16 = arith.constant dense<0.000000e+00> : vector<1xf32>
    %36 = vector.multi_reduction <add>, %35, %cst_16 [1, 2] : vector<1x8x1xf32> to vector<1xf32>
    %37 = vector.shape_cast %36 : vector<1xf32> to vector<1x1x1xf32>
    %38 = vector.extract %37[0, 0, 0] : f32 from vector<1x1x1xf32>
    %39 = vector.broadcast %38 : f32 to vector<1x1xf32>
    %40 = arith.addf %34, %39 : vector<1x1xf32>
    %c0_17 = arith.constant 0 : index
    %c0_18 = arith.constant 0 : index
    %41 = vector.load %arg6[%c0_17, %c0_18] : memref<1x1xf32, #tpu.memory_space<vmem>>, vector<1x1xf32>
    tpu.vector_store %arg6[%c0_17, %c0_18], %40 {strides = array<i32>} : memref<1x1xf32, #tpu.memory_space<vmem>>, vector<1x1xf32>,
    %c0_19 = arith.constant 0 : index
    %c0_20 = arith.constant 0 : index
    %42 = vector.load %arg7[%c0_19, %c0_20] : memref<1x1xf32, #tpu.memory_space<vmem>>, vector<1x1xf32>
    %43 = arith.extui %31 : vector<8x1xi1> to vector<8x1xi32>
    %44 = arith.sitofp %43 : vector<8x1xi32> to vector<8x1xf32>
    %45 = vector.shape_cast %44 : vector<8x1xf32> to vector<1x8x1xf32>
    %cst_21 = arith.constant dense<0.000000e+00> : vector<1xf32>
    %46 = vector.multi_reduction <add>, %45, %cst_21 [1, 2] : vector<1x8x1xf32> to vector<1xf32>
    %47 = vector.shape_cast %46 : vector<1xf32> to vector<1x1x1xf32>
    %48 = vector.extract %47[0, 0, 0] : f32 from vector<1x1x1xf32>
    %49 = vector.broadcast %48 : f32 to vector<1x1xf32>
    %50 = arith.addf %42, %49 : vector<1x1xf32>
    %c0_22 = arith.constant 0 : index
    %c0_23 = arith.constant 0 : index
    %51 = vector.load %arg7[%c0_22, %c0_23] : memref<1x1xf32, #tpu.memory_space<vmem>>, vector<1x1xf32>
    tpu.vector_store %arg7[%c0_22, %c0_23], %50 {strides = array<i32>} : memref<1x1xf32, #tpu.memory_space<vmem>>, vector<1x1xf32>,
    %c0_i32_24 = arith.constant 0 : i32
    %52 = arith.cmpi eq, %arg0, %c0_i32_24 : i32
    %53 = arith.extui %52 : i1 to i32
    %c0_i32_25 = arith.constant 0 : i32
    %54 = arith.cmpi ne, %53, %c0_i32_25 : i32
    scf.if %54 {
      %c0_26 = arith.constant 0 : index
      %c0_27 = arith.constant 0 : index
      %55 = vector.load %arg6[%c0_26, %c0_27] : memref<1x1xf32, #tpu.memory_space<vmem>>, vector<1x1xf32>
      %c0_28 = arith.constant 0 : index
      %c0_29 = arith.constant 0 : index
      %56 = vector.load %arg7[%c0_28, %c0_29] : memref<1x1xf32, #tpu.memory_space<vmem>>, vector<1x1xf32>
      %57 = arith.divf %55, %56 : vector<1x1xf32>
      %c0_30 = arith.constant 0 : index
      %c0_31 = arith.constant 0 : index
      %58 = vector.load %arg5[%c0_30, %c0_31] : memref<1x1xf32, #tpu.memory_space<vmem>>, vector<1x1xf32>
      tpu.vector_store %arg5[%c0_30, %c0_31], %57 {strides = array<i32>} : memref<1x1xf32, #tpu.memory_space<vmem>>, vector<1x1xf32>,
    } else {
    }
    return
  }
  func.func @transform_0(%arg0: i32) -> (i32, i32) {
    %c0_i32 = arith.constant 0 : i32
    %c0_i32_0 = arith.constant 0 : i32
    return %arg0, %c0_i32 : i32, i32
  }
  func.func @transform_1(%arg0: i32) -> (i32, i32) {
    %c0_i32 = arith.constant 0 : i32
    %c0_i32_0 = arith.constant 0 : i32
    %c0_i32_1 = arith.constant 0 : i32
    return %c0_i32, %c0_i32_0 : i32, i32
  }
  func.func @transform_2(%arg0: i32) -> (i32, i32) {
    %c0_i32 = arith.constant 0 : i32
    %c0_i32_0 = arith.constant 0 : i32
    return %arg0, %c0_i32 : i32, i32
  }
  func.func @transform_3(%arg0: i32) -> (i32, i32) {
    %c0_i32 = arith.constant 0 : i32
    %c0_i32_0 = arith.constant 0 : i32
    return %arg0, %c0_i32 : i32, i32
  }
  func.func @transform_4(%arg0: i32) -> (i32, i32) {
    %c0_i32 = arith.constant 0 : i32
    %c0_i32_0 = arith.constant 0 : i32
    %c0_i32_1 = arith.constant 0 : i32
    return %c0_i32, %c0_i32_0 : i32, i32
  }
}

</mosaic_0001>

<llo_original>
// kernel: tpu_custom_call.1
$region0: #{tpu_custom_call.1}
  #allocation0 [shape = 'u32[]', space=smem, size = 0x4, offset = 0x4, fixed_abs, tag = 'smem constant byte address 0x4 - core index']
  #allocation1 [shape = 'u32[144,128]{1,0:T(1,128)}', space=vmem, size = 0x12000, scoped, tag = 'internal scratch']
  #allocation2 [shape = 'f32[1,1]{1,0:T(1,128)}', space=vmem, size = 0x200, scoped, tag = 'scratch operand']
  #allocation3 [shape = 'f32[1,1]{1,0:T(1,128)}', space=vmem, size = 0x200, scoped, tag = 'scratch operand']
  %s0 = inlined_call_operand.hbm [shape: f32[8,32], index: 0, kind: input, shape index: {}]
  %s1 = inlined_call_operand.hbm [shape: f32[8,32], index: 1, kind: input, shape index: {}]
  %s2 = inlined_call_operand.hbm [shape: f32[8,32], index: 2, kind: input, shape index: {}]
  %s3 = inlined_call_operand.vmem [shape: s8[8,8], index: 3, kind: input, shape index: {}]
  %s4 = inlined_call_operand.hbm [shape: f32[1,1], index: 4, kind: output, shape index: {}]
  %s5 = sld [smem:[#allocation0]]
  $region46: #{tpu_custom_call.1} parent=0
    _
  %s7 = ssub.s32 1, %s5
  %s8 = scalar_select 0, %s7, %s5
  $region1: #{tpu_custom_call.1} parent=0
    #allocation4 [shape = 'u8[4096]{0}', space=vmem, size = 0x1000, scoped, tag = 'input window, operand 0, single buffered']
    #allocation5 [shape = 's32[1]{0}', space=sflag, size = 0x4, scoped, tag = 'scoped memory for tpu_custom_call.1']
    #allocation6 [shape = 's32[1]{0}', space=sflag, size = 0x4, scoped, tag = 'scoped memory for tpu_custom_call.1']
    #allocation7 [shape = 'u8[4096]{0}', space=vmem, size = 0x1000, scoped, tag = 'input window, operand 1, single buffered']
    #allocation8 [shape = 's32[1]{0}', space=sflag, size = 0x4, scoped, tag = 'scoped memory for tpu_custom_call.1']
    #allocation9 [shape = 'u8[4096]{0}', space=vmem, size = 0x1000, scoped, tag = 'input window, operand 2, single buffered']
    #allocation10 [shape = 'u8[512]{0}', space=vmem, size = 0x400, scoped, tag = 'output window, operand 0, single buffered']
    %9 = vsyncpa [#allocation5], 0
    %10 = vsyncpa [#allocation8], 0
    %11 = vsyncpa [#allocation6], 0
    // Predicated region
    $region2: #{tpu_custom_call.1} parent=1 // pred_check
      _
    $region3: #{tpu_custom_call.1} parent=1 // pred_check_branch
      %13 = sbr.rel (0) target = $region5
    $region4: #{tpu_custom_call.1} parent=1 // pred_region
      %s15 = ssub.s32 128, 128
      %16 = vsyncadd [#allocation5], %s15
      %s18 = sshll.u32 [#allocation4], 4
      %s19 = int_to_ptr.vmem [resolvable:$true] %s18
      %21 = dma.hbm_to_vmem [thread:$0]  %s0, 128, %s19, [#allocation5]
    $region5: #{tpu_custom_call.1} parent=1 // pred_fallthru
      _
    // Predicated region
    $region6: #{tpu_custom_call.1} parent=1 // pred_check
      _
    $region7: #{tpu_custom_call.1} parent=1 // pred_check_branch
      %23 = sbr.rel (0) target = $region9
    $region8: #{tpu_custom_call.1} parent=1 // pred_region
      %s25 = ssub.s32 128, 128
      %26 = vsyncadd [#allocation8], %s25
      %s28 = sshll.u32 [#allocation7], 4
      %s29 = int_to_ptr.vmem [resolvable:$true] %s28
      %31 = dma.hbm_to_vmem [thread:$0]  %s1, 128, %s29, [#allocation8]
    $region9: #{tpu_custom_call.1} parent=1 // pred_fallthru
      _
    // Predicated region
    $region10: #{tpu_custom_call.1} parent=1 // pred_check
      _
    $region11: #{tpu_custom_call.1} parent=1 // pred_check_branch
      %33 = sbr.rel (0) target = $region13
    $region12: #{tpu_custom_call.1} parent=1 // pred_region
      %s35 = ssub.s32 128, 128
      %36 = vsyncadd [#allocation8], %s35
      %s38 = sshll.u32 [#allocation9], 4
      %s39 = int_to_ptr.vmem [resolvable:$true] %s38
      %41 = dma.hbm_to_vmem [thread:$0]  %s2, 128, %s39, [#allocation8]
    $region13: #{tpu_custom_call.1} parent=1 // pred_fallthru
      _
    // Predicated region
    $region14: #{tpu_custom_call.1} parent=1 // pred_check
      _
    $region15: #{tpu_custom_call.1} parent=1 // pred_check_branch
      %43 = sbr.rel (0) target = $region17
    $region16: #{tpu_custom_call.1} parent=1 // pred_region
      _
    $region17: #{tpu_custom_call.1} parent=1 // pred_fallthru
      _
    // Predicated region
    $region18: #{tpu_custom_call.1} parent=1 // pred_check
      _
    $region19: #{tpu_custom_call.1} parent=1 // pred_check_branch
      %45 = sbr.rel (0) target = $region21
    $region20: #{tpu_custom_call.1} parent=1 // pred_region
      %46 = dma.done [#allocation5], 128
    $region21: #{tpu_custom_call.1} parent=1 // pred_fallthru
      _
    // Predicated region
    $region22: #{tpu_custom_call.1} parent=1 // pred_check
      _
    $region23: #{tpu_custom_call.1} parent=1 // pred_check_branch
      %48 = sbr.rel (0) target = $region25
    $region24: #{tpu_custom_call.1} parent=1 // pred_region
      %49 = dma.done [#allocation8], 128
    $region25: #{tpu_custom_call.1} parent=1 // pred_fallthru
      _
    // Predicated region
    $region26: #{tpu_custom_call.1} parent=1 // pred_check
      _
    $region27: #{tpu_custom_call.1} parent=1 // pred_check_branch
      %51 = sbr.rel (0) target = $region29
    $region28: #{tpu_custom_call.1} parent=1 // pred_region
      %52 = dma.done [#allocation8], 128
    $region29: #{tpu_custom_call.1} parent=1 // pred_fallthru
      _
    %p55 = scmp.eq.s32.totalorder 0, 0
    // Predicated region
    $region30: #{tpu_custom_call.1} parent=1 // pred_check
      %p56 = pneg %p55
    $region31: #{tpu_custom_call.1} parent=1 // pred_check_branch
      %58 = sbr.rel (%p56) target = $region33
    $region32: #{tpu_custom_call.1} parent=1 // pred_region
      %vm59 = vcmask 0
      %60 = vst.msk [vmem:[#allocation2] sm:$0x1] %vm59, 0.0
      %61 = vst.msk [vmem:[#allocation3] sm:$0x1] %vm59, 0.0
    $region33: #{tpu_custom_call.1} parent=1 // pred_fallthru
      _
    %v62 = vld [vmem:[#allocation4] sm:$0xff]
    %v63 = vld [vmem:[#allocation9] sm:$0xff]
    %v64 = vld [vmem:[#allocation7] sm:$0xff]
    %vm65 = vcmask 261120
    %v67 = vsel %vm65, %v62, 0
    %v70 = vsel %vm65, %v64, 0
    %72 = vmatprep.subr.mxu0 0.0
    %73 = vmatpush1.xpose.msra.mxu0 0.0
    %74 = vmatprep.subr.mxu0 0.0
    %75 = vmatpush1.xpose.msra.mxu0 0.0
    %76 = vmatprep.subr.mxu0 0.0
    %77 = vmatpush1.xpose.msra.mxu0 0.0
    %78 = vmatprep.subr.mxu0 0.0
    %79 = vmatpush1.xpose.msra.mxu0 0.0
    %80 = vmatprep.subr.mxu0 0.0
    %81 = vmatpush1.xpose.msra.mxu0 0.0
    %82 = vmatprep.subr.mxu0 0.0
    %83 = vmatpush1.xpose.msra.mxu0 0.0
    %84 = vmatprep.subr.mxu0 0.0
    %85 = vmatpush1.xpose.msra.mxu0 0.0
    %86 = vmatprep.subr.mxu0 0.0
    %87 = vmatpush1.xpose.msra.mxu0 0.0
    %88 = vmatprep.subr.mxu0 0.0
    %89 = vmatpush1.xpose.msra.mxu0 0.0
    %90 = vmatprep.subr.mxu0 0.0
    %91 = vmatpush1.xpose.msra.mxu0 0.0
    %92 = vmatprep.subr.mxu0 0.0
    %93 = vmatpush1.xpose.msra.mxu0 0.0
    %94 = vmatprep.subr.mxu0 0.0
    %95 = vmatpush1.xpose.msra.mxu0 0.0
    %96 = vmatprep.subr.mxu0 0.0
    %97 = vmatpush1.xpose.msra.mxu0 0.0
    %98 = vmatprep.subr.mxu0 0.0
    %99 = vmatpush1.xpose.msra.mxu0 0.0
    %100 = vmatprep.subr.mxu0 0.0
    %101 = vmatpush1.xpose.msra.mxu0 0.0
    %102 = vmatprep.subr.mxu0 0.0
    %103 = vmatpush1.xpose.msra.mxu0 %v70
    %104 = vmatprep.subr.mxu0 0.0
    %105 = vmatpush2.xpose.msra.mxu0 0.0
    %106 = vmatprep.subr.mxu0 0.0
    %107 = vmatpush2.xpose.msra.mxu0 0.0
    %108 = vmatprep.subr.mxu0 0.0
    %109 = vmatpush2.xpose.msra.mxu0 0.0
    %110 = vmatprep.subr.mxu0 0.0
    %111 = vmatpush2.xpose.msra.mxu0 0.0
    %112 = vmatprep.subr.mxu0 0.0
    %113 = vmatpush2.xpose.msra.mxu0 0.0
    %114 = vmatprep.subr.mxu0 0.0
    %115 = vmatpush2.xpose.msra.mxu0 0.0
    %116 = vmatprep.subr.mxu0 0.0
    %117 = vmatpush2.xpose.msra.mxu0 0.0
    %118 = vmatprep.subr.mxu0 0.0
    %119 = vmatpush2.xpose.msra.mxu0 0.0
    %120 = vmatprep.subr.mxu0 0.0
    %121 = vmatpush2.xpose.msra.mxu0 0.0
    %122 = vmatprep.subr.mxu0 0.0
    %123 = vmatpush2.xpose.msra.mxu0 0.0
    %124 = vmatprep.subr.mxu0 0.0
    %125 = vmatpush2.xpose.msra.mxu0 0.0
    %126 = vmatprep.subr.mxu0 0.0
    %127 = vmatpush2.xpose.msra.mxu0 0.0
    %128 = vmatprep.subr.mxu0 0.0
    %129 = vmatpush2.xpose.msra.mxu0 0.0
    %130 = vmatprep.subr.mxu0 0.0
    %131 = vmatpush2.xpose.msra.mxu0 0.0
    %132 = vmatprep.subr.mxu0 0.0
    %133 = vmatpush2.xpose.msra.mxu0 0.0
    %134 = vmatprep.subr.mxu0 0.0
    %135 = vmatpush2.xpose.msra.mxu0 0.0
    %136 = vmatprep.mubr.f32.mxu0 0.0
    %137 = vmatmul.mubr.f32.gmra.mxu0 %v67
    %v138 = vpop.f32.mrf.mxu0
    %v139 = vadd.f32 0.0, %v138
    %v140 = vpop.f32.mrf.mxu0
    %141 = vdwg.mxu0
    %v142 = vmul.f32 %v62, %v63
    %v143 = vsel %vm65, %v142, 0.0
    %144 = vadd.xlane.f32.xlu0 %v143
    %v145 = vpop.xlane.xlu0 %144
    %v146 = vsub.f32 %v139, %v145
    %v147 = vmul.f32 %v146, 1.442695
    %v148 = vpow.pop %v147
    %v149 = vld [vmem:[%s3] sm:$0x3]
    %vm150 = vnez %v149
    %v151 = vsel %vm150, 16843009, 0
    %v152 = vunpack.c.0.s8 %v151
    %vm153 = vcmp.ne.s32.totalorder %v152, 0
    %v154 = vsel %vm153, %v148, 0.0
    %vm155 = vcmask 64512
    %v156 = vsel %vm155, %v154, 0.0
    %157 = vadd.xlane.f32.xlu0 %v156
    %v158 = vpop.xlane.xlu0 %157
    %v159 = vadd.f32 %v158, 1.0
    %v160 = vlog2.pop %v159
    %v161 = vmul.f32 %v160, 0.6931472
    %s162 = smul.u32 0, 8
    %v163 = vlaneseq
    %v164 = vshrl.u32 %v163, 7
    %v165 = vstv %s162
    %v166 = vadd.s32 %v165, %v164
    %vm167 = vcmp.lt.s32.totalorder %v166, 4
    %vm168 = vcmp.ne.f32.partialorder %v161, %v161
    %vm169 = vmxor %vm168, 1
    %vm170 = vmand %vm167, %vm169
    %v171 = vsel %vm170, %v161, 0.0
    %v172 = vld [vmem:[#allocation2] sm:$0x1]
    %vm173 = vcmask 7168
    %v174 = vsel %vm173, %v171, 0.0
    %175 = vadd.xlane.f32.xlu0 %v174
    %v176 = vpop.xlane.xlu0 %175
    %v177 = vrot.slane %v176, 4
    %v178 = vadd.f32 %v176, %v177
    %v179 = vrot.slane %v178, 2
    %v180 = vadd.f32 %v178, %v179
    %v181 = vrot.slane %v180, 1
    %v182 = vadd.f32 %v180, %v181
    %s183 = vtos %v182
    %v184 = vstv %s183
    %v185 = vadd.f32 %v172, %v184
    %vm186 = vcmask 0
    %187 = vst.msk [vmem:[#allocation2] sm:$0x1] %vm186, %v185
    %v188 = vld [vmem:[#allocation3] sm:$0x1]
    %v189 = vsel %vm170, 1, 0
    %v190 = vcvt.s32.f32 %v189
    %v191 = vsel %vm173, %v190, 0.0
    %192 = vadd.xlane.f32.xlu0 %v191
    %v193 = vpop.xlane.xlu0 %192
    %v194 = vrot.slane %v193, 4
    %v195 = vadd.f32 %v193, %v194
    %v196 = vrot.slane %v195, 2
    %v197 = vadd.f32 %v195, %v196
    %v198 = vrot.slane %v197, 1
    %v199 = vadd.f32 %v197, %v198
    %s200 = vtos %v199
    %v201 = vstv %s200
    %v202 = vadd.f32 %v188, %v201
    %203 = vst.msk [vmem:[#allocation3] sm:$0x1] %vm186, %v202
    // Predicated region
    $region34: #{tpu_custom_call.1} parent=1 // pred_check
      %p204 = pneg %p55
    $region35: #{tpu_custom_call.1} parent=1 // pred_check_branch
      %206 = sbr.rel (%p204) target = $region37
    $region36: #{tpu_custom_call.1} parent=1 // pred_region
      %v207 = vld [vmem:[#allocation2] sm:$0x1]
      %v208 = vld [vmem:[#allocation3] sm:$0x1]
      %v209 = vrcp.pop %v208
      %v210 = vmul.f32 %v207, %v209
      %211 = vst.msk [vmem:[#allocation10] sm:$0x1] %vm186, %v210
    $region37: #{tpu_custom_call.1} parent=1 // pred_fallthru
      _
    // Predicated region
    $region38: #{tpu_custom_call.1} parent=1 // pred_check
      _
    $region39: #{tpu_custom_call.1} parent=1 // pred_check_branch
      %213 = sbr.rel (0) target = $region41
    $region40: #{tpu_custom_call.1} parent=1 // pred_region
      %s215 = ssub.s32 16, 16
      %216 = vsyncadd [#allocation6], %s215
      %s218 = sshll.u32 [#allocation10], 4
      %s219 = int_to_ptr.vmem [resolvable:$true] %s218
      %221 = dma.vmem_to_hbm [thread:$0]  %s219, 16, %s4, [#allocation6]
    $region41: #{tpu_custom_call.1} parent=1 // pred_fallthru
      _
    // Predicated region
    $region42: #{tpu_custom_call.1} parent=1 // pred_check
      _
    $region43: #{tpu_custom_call.1} parent=1 // pred_check_branch
      %223 = sbr.rel (0) target = $region45
    $region44: #{tpu_custom_call.1} parent=1 // pred_region
      %224 = dma.done [#allocation6], 16
    $region45: #{tpu_custom_call.1} parent=1 // pred_fallthru
      _
    %225 = vsyncpa [#allocation5], 1
    %226 = vsyncpa [#allocation8], 1
    %227 = vsyncpa [#allocation6], 1

</llo_original>
